<compile_context>
chip_gen: v7x
topology: tpu7x:2x2x1
jax: 0.10.0
libtpu: 0.0.40
codegen_flags: <defaults>
</compile_context>

<pallas_src>
import math

import jax
import jax.numpy as jnp
from jax.experimental import pallas as pl
from jax.experimental.pallas import tpu as pltpu


def _round_up(n, m):
    return ((n + m - 1) // m) * m


def _disc_kernel(x_ref, xt_ref, w1a_ref, w1b_ref, b1_ref, w2_ref, b2_ref, out_ref):
    # Layer 1: split-K matmul (rows of W1 are ordered [x ; x_tild]) + bias + ReLU.
    h = jnp.dot(x_ref[...], w1a_ref[...], preferred_element_type=jnp.float32)
    h = h + jnp.dot(xt_ref[...], w1b_ref[...], preferred_element_type=jnp.float32)
    h = jnp.maximum(h + b1_ref[...], 0.0)            # b1 (1, 4F) broadcasts over batch

    # Dropout(0.5) -> identity in eval mode.
    # TODO(synk): training-mode dropout via pltpu.prng_seed / pltpu.prng_random_bits.

    # Layer 2 (4F -> 1), contracted so the result is a lane-dense (1, TB) row:
    #   w2_row (1, 4F) . h (TB, 4F)  over the 4F axis.
    p_row = jax.lax.dot_general(
        w2_ref[...], h,
        dimension_numbers=(((1,), (1,)), ((), ())),
        preferred_element_type=jnp.float32,
    )                                                 # (1, TB)
    out_ref[...] = (p_row + b2_ref[0]).astype(out_ref.dtype)


def discriminator_forward(x, x_tild, w1, b1, w2, b2, *, tb=128):
    """x, x_tild: (B, F) f32.  w1: (2F, 4F), b1: (1, 4F), w2: (4F, 1), b2: (1, 1).
    Returns (B,) f32, matching PyTorch's p.view((-1,))."""
    B, F = x.shape
    H = w1.shape[1]                                   # 4F
    assert w1.shape[0] == 2 * F

    # One-time wrapper-side layout plumbing (not compute).
    w1a = w1[:F, :]                                   # (F, 4F)
    w1b = w1[F:, :]                                   # (F, 4F)
    b1_row = b1.reshape(1, H)
    w2_row = w2.reshape(1, H)                         # lane-dense weight row
    b2_s = b2.reshape((1,))                           # scalar -> SMEM

    # Batch tiling: TB rows per grid step (clipped for tiny batches), pad B up.
    tb = min(tb, _round_up(B, 8))
    nblk = pl.cdiv(B, tb)
    b_pad = nblk * tb
    if b_pad != B:
        pad = ((0, b_pad - B), (0, 0))
        x = jnp.pad(x, pad)
        x_tild = jnp.pad(x_tild, pad)

    out = pl.pallas_call(
        _disc_kernel,
        out_shape=jax.ShapeDtypeStruct((1, b_pad), jnp.float32),
        grid=(nblk,),
        in_specs=[
            pl.BlockSpec((tb, F), lambda i: (i, 0)),             # x       (batch-tiled)
            pl.BlockSpec((tb, F), lambda i: (i, 0)),             # x_tild  (batch-tiled)
            pl.BlockSpec((F, H), lambda i: (0, 0)),              # W1[:F]  (VMEM-resident)
            pl.BlockSpec((F, H), lambda i: (0, 0)),              # W1[F:]  (VMEM-resident)
            pl.BlockSpec((1, H), lambda i: (0, 0)),              # b1
            pl.BlockSpec((1, H), lambda i: (0, 0)),              # w2 row
            pl.BlockSpec(memory_space=pltpu.MemorySpace.SMEM),   # b2 scalar
        ],
        out_specs=pl.BlockSpec((1, tb), lambda i: (0, i)),       # lane-dense output row
        compiler_params=pltpu.CompilerParams(
            dimension_semantics=("parallel",),        # megacore sharding on v7x
        ),
    )(x, x_tild, w1a, w1b, b1_row, w2_row, b2_s)

    return out.reshape((-1,))[:B]


def init_params(key, feature_dim):
    """Xavier-uniform weights (as in the PyTorch __init__); PyTorch-default biases."""
    k1, k2, k3, k4 = jax.random.split(key, 4)
    fan_in1, fan_out1 = 2 * feature_dim, 4 * feature_dim
    fan_in2, fan_out2 = 4 * feature_dim, 1

    bound1 = math.sqrt(6.0 / (fan_in1 + fan_out1))
    bound2 = math.sqrt(6.0 / (fan_in2 + fan_out2))

    # Stored pre-transposed: (in_features, out_features)
    w1 = jax.random.uniform(k1, (fan_in1, fan_out1), jnp.float32, -bound1, bound1)
    w2 = jax.random.uniform(k2, (fan_in2, fan_out2), jnp.float32, -bound2, bound2)

    bb1 = 1.0 / math.sqrt(fan_in1)
    bb2 = 1.0 / math.sqrt(fan_in2)
    b1 = jax.random.uniform(k3, (1, fan_out1), jnp.float32, -bb1, bb1)
    b2 = jax.random.uniform(k4, (1, fan_out2), jnp.float32, -bb2, bb2)
    return w1, b1, w2, b2


def _reference(x, x_tild, w1, b1, w2, b2):
    x_all = jnp.concatenate([x, x_tild], axis=-1)
    h = jnp.maximum(x_all @ w1 + b1, 0.0)
    return (h @ w2 + b2).reshape((-1,))


if __name__ == "__main__":
    key = jax.random.PRNGKey(0)
    kx, kxt, kp = jax.random.split(key, 3)

    F = 32                                  # feature_dim
    w1, b1, w2, b2 = init_params(kp, F)

    # Main check: ragged batch over two grid steps (exercises grid, pipelining, and padding).
    B = 200
    x = jax.random.normal(kx, (B, F), jnp.float32)
    x_tild = jax.random.normal(kxt, (B, F), jnp.float32)

    p = discriminator_forward(x, x_tild, w1, b1, w2, b2, tb=128)
    jax.block_until_ready(p)

    ref = _reference(x, x_tild, w1, b1, w2, b2)
    assert p.shape == (B,)
    assert jnp.allclose(p, ref, atol=1e-4, rtol=1e-4)

    # Tiny batch (exercises the small-tile / single-block path).
    B2 = 5
    x2 = jax.random.normal(jax.random.fold_in(kx, 1), (B2, F), jnp.float32)
    xt2 = jax.random.normal(jax.random.fold_in(kxt, 1), (B2, F), jnp.float32)
    p2 = discriminator_forward(x2, xt2, w1, b1, w2, b2)
    jax.block_until_ready(p2)
    ref2 = _reference(x2, xt2, w1, b1, w2, b2)
    assert p2.shape == (B2,)
    assert jnp.allclose(p2, ref2, atol=1e-4, rtol=1e-4)

    print("KERNEL_OK")
</pallas_src>

<mosaic_0001>
module attributes {stable_mosaic.version = 11 : i64} {
  func.func @_disc_kernel(%arg0: i32, %arg1: memref<128x32xf32, #tpu.memory_space<vmem>>, %arg2: memref<128x32xf32, #tpu.memory_space<vmem>>, %arg3: memref<32x128xf32, #tpu.memory_space<vmem>>, %arg4: memref<32x128xf32, #tpu.memory_space<vmem>>, %arg5: memref<1x128xf32, #tpu.memory_space<vmem>>, %arg6: memref<1x128xf32, #tpu.memory_space<vmem>>, %arg7: memref<1xf32, #tpu.memory_space<smem>>, %arg8: memref<1x128xf32, #tpu.memory_space<vmem>>) attributes {dimension_semantics = [#tpu.dimension_semantics<parallel>], iteration_bounds = array<i64: 2>, scalar_prefetch = 0 : i64, scratch_operands = 0 : i64, tpu.core_type = #tpu.core_type<tc>, window_params = [{transform_indices = @transform_0, window_bounds = array<i64: 128, 32>}, {transform_indices = @transform_1, window_bounds = array<i64: 128, 32>}, {pipeline_mode = #tpu.pipeline_mode<synchronous>, transform_indices = @transform_2, window_bounds = array<i64: 32, 128>}, {pipeline_mode = #tpu.pipeline_mode<synchronous>, transform_indices = @transform_3, window_bounds = array<i64: 32, 128>}, {pipeline_mode = #tpu.pipeline_mode<synchronous>, transform_indices = @transform_4, window_bounds = array<i64: 1, 128>}, {pipeline_mode = #tpu.pipeline_mode<synchronous>, transform_indices = @transform_5, window_bounds = array<i64: 1, 128>}, {transform_indices = @transform_6, window_bounds = array<i64: 1>}, {transform_indices = @transform_7, window_bounds = array<i64: 1, 128>}]} {
    %c0 = arith.constant 0 : index
    %c0_0 = arith.constant 0 : index
    %0 = vector.load %arg1[%c0, %c0_0] : memref<128x32xf32, #tpu.memory_space<vmem>>, vector<128x32xf32>
    %c0_1 = arith.constant 0 : index
    %c0_2 = arith.constant 0 : index
    %1 = vector.load %arg3[%c0_1, %c0_2] : memref<32x128xf32, #tpu.memory_space<vmem>>, vector<32x128xf32>
    %cst = arith.constant dense<0.000000e+00> : vector<128x128xf32>
    %2 = tpu.matmul %0, %1, %cst {dimension_numbers = #tpu.dot_dimension_numbers<[1], [0], [0], [1], [0, 0, 1, 1], [], []>} : vector<128x32xf32>, vector<32x128xf32>, vector<128x128xf32> -> vector<128x128xf32>
    %c0_3 = arith.constant 0 : index
    %c0_4 = arith.constant 0 : index
    %3 = vector.load %arg2[%c0_3, %c0_4] : memref<128x32xf32, #tpu.memory_space<vmem>>, vector<128x32xf32>
    %c0_5 = arith.constant 0 : index
    %c0_6 = arith.constant 0 : index
    %4 = vector.load %arg4[%c0_5, %c0_6] : memref<32x128xf32, #tpu.memory_space<vmem>>, vector<32x128xf32>
    %cst_7 = arith.constant dense<0.000000e+00> : vector<128x128xf32>
    %5 = tpu.matmul %3, %4, %cst_7 {dimension_numbers = #tpu.dot_dimension_numbers<[1], [0], [0], [1], [0, 0, 1, 1], [], []>} : vector<128x32xf32>, vector<32x128xf32>, vector<128x128xf32> -> vector<128x128xf32>
    %6 = arith.addf %2, %5 : vector<128x128xf32>
    %c0_8 = arith.constant 0 : index
    %c0_9 = arith.constant 0 : index
    %7 = vector.load %arg5[%c0_8, %c0_9] : memref<1x128xf32, #tpu.memory_space<vmem>>, vector<1x128xf32>
    %8 = vector.broadcast %7 : vector<1x128xf32> to vector<128x128xf32>
    %9 = arith.addf %6, %8 : vector<128x128xf32>
    %cst_10 = arith.constant 0.000000e+00 : f32
    %10 = vector.broadcast %cst_10 : f32 to vector<128x128xf32>
    %11 = arith.maximumf %9, %10 : vector<128x128xf32>
    %c0_11 = arith.constant 0 : index
    %c0_12 = arith.constant 0 : index
    %12 = vector.load %arg6[%c0_11, %c0_12] : memref<1x128xf32, #tpu.memory_space<vmem>>, vector<1x128xf32>
    %cst_13 = arith.constant dense<0.000000e+00> : vector<1x128xf32>
    %13 = tpu.matmul %12, %11, %cst_13 {dimension_numbers = #tpu.dot_dimension_numbers<[1], [1], [0], [0], [0, 0, 1, 0], [], []>} : vector<1x128xf32>, vector<128x128xf32>, vector<1x128xf32> -> vector<1x128xf32>
    %c0_14 = arith.constant 0 : index
    %14 = memref.load %arg7[%c0_14] : memref<1xf32, #tpu.memory_space<smem>>
    %15 = vector.broadcast %14 : f32 to vector<1x128xf32>
    %16 = arith.addf %13, %15 : vector<1x128xf32>
    %c0_15 = arith.constant 0 : index
    %c0_16 = arith.constant 0 : index
    %17 = vector.load %arg8[%c0_15, %c0_16] : memref<1x128xf32, #tpu.memory_space<vmem>>, vector<1x128xf32>
    tpu.vector_store %arg8[%c0_15, %c0_16], %16 {strides = array<i32>} : memref<1x128xf32, #tpu.memory_space<vmem>>, vector<1x128xf32>,
    return
  }
  func.func @transform_0(%arg0: i32) -> (i32, i32) {
    %c0_i32 = arith.constant 0 : i32
    %c0_i32_0 = arith.constant 0 : i32
    return %arg0, %c0_i32 : i32, i32
  }
  func.func @transform_1(%arg0: i32) -> (i32, i32) {
    %c0_i32 = arith.constant 0 : i32
    %c0_i32_0 = arith.constant 0 : i32
    return %arg0, %c0_i32 : i32, i32
  }
  func.func @transform_2(%arg0: i32) -> (i32, i32) {
    %c0_i32 = arith.constant 0 : i32
    %c0_i32_0 = arith.constant 0 : i32
    %c0_i32_1 = arith.constant 0 : i32
    return %c0_i32, %c0_i32_0 : i32, i32
  }
  func.func @transform_3(%arg0: i32) -> (i32, i32) {
    %c0_i32 = arith.constant 0 : i32
    %c0_i32_0 = arith.constant 0 : i32
    %c0_i32_1 = arith.constant 0 : i32
    return %c0_i32, %c0_i32_0 : i32, i32
  }
  func.func @transform_4(%arg0: i32) -> (i32, i32) {
    %c0_i32 = arith.constant 0 : i32
    %c0_i32_0 = arith.constant 0 : i32
    %c0_i32_1 = arith.constant 0 : i32
    return %c0_i32, %c0_i32_0 : i32, i32
  }
  func.func @transform_5(%arg0: i32) -> (i32, i32) {
    %c0_i32 = arith.constant 0 : i32
    %c0_i32_0 = arith.constant 0 : i32
    %c0_i32_1 = arith.constant 0 : i32
    return %c0_i32, %c0_i32_0 : i32, i32
  }
  func.func @transform_6(%arg0: i32) -> i32 {
    %c0_i32 = arith.constant 0 : i32
    %c0_i32_0 = arith.constant 0 : i32
    return %c0_i32 : i32
  }
  func.func @transform_7(%arg0: i32) -> (i32, i32) {
    %c0_i32 = arith.constant 0 : i32
    %c0_i32_0 = arith.constant 0 : i32
    return %c0_i32, %arg0 : i32, i32
  }
}

</mosaic_0001>

<llo_original>
// kernel: tpu_custom_call.1
$region0: #{tpu_custom_call.1}
  #allocation0 [shape = 'u32[]', space=smem, size = 0x4, offset = 0x4, fixed_abs, tag = 'smem constant byte address 0x4 - core index']
  #allocation1 [shape = 'u32[144,128]{1,0:T(1,128)}', space=vmem, size = 0x12000, scoped, tag = 'internal scratch']
  #allocation2 [shape = 'f32[1]{0:T(128)S(6)}', space=smem, size = 0x200, scoped, tag = 'scoped memory for tpu_custom_call.1']
  %s0 = inlined_call_operand.vmem [shape: f32[256,32], index: 0, kind: input, shape index: {}]
  %s1 = inlined_call_operand.vmem [shape: f32[256,32], index: 1, kind: input, shape index: {}]
  %s2 = inlined_call_operand.vmem [shape: f32[32,128], index: 2, kind: input, shape index: {}]
  %s3 = inlined_call_operand.vmem [shape: f32[32,128], index: 3, kind: input, shape index: {}]
  %s4 = inlined_call_operand.vmem [shape: f32[1,128], index: 4, kind: input, shape index: {}]
  %s5 = inlined_call_operand.vmem [shape: f32[1,128], index: 5, kind: input, shape index: {}]
  %s6 = inlined_call_operand.<no memory space> [shape: f32[1], index: 6, kind: input, shape index: {}]
  %s7 = inlined_call_operand.hbm [shape: f32[1,256], index: 7, kind: output, shape index: {}]
  %s8 = sld [smem:[#allocation0]]
  $region61: #{tpu_custom_call.1} parent=0
    _
  %s10 = ssub.s32 1, %s8
  %s11 = scalar_select 0, %s10, %s8
  %12 = sst [smem:[#allocation2]] %s6
  $region1: #{tpu_custom_call.1} parent=0
    #allocation3 [shape = 'u8[1024]{0}', space=vmem, size = 0x400, scoped, tag = 'output window, operand 0']
    #allocation4 [shape = 's32[2]{0}', space=sflag, size = 0x8, scoped, tag = 'scoped memory for tpu_custom_call.1']
    %13 = vsyncpa [#allocation4], 0
    %s14 = scalar_lea.sflag [#allocation4], 1
    %15 = vsyncpa %s14, 0
    loop: start=0, step=1, limit=4
    $region2: #{tpu_custom_call.1} parent=1 // loop_pre_header
      _
    $region3: #{tpu_custom_call.1} parent=1 // loop_header
      %s17 = sphi 0, %s21
      %p18 = scmp.ge.s32.totalorder %s17, 4
      %s27 = sphi 0, %s29
      %s30 = sphi 0, %s27
      %s31 = sphi 0, %s30
      %s47 = sphi 0, %s31
      %s53 = sphi 0, %s55
      %s56 = sphi 0, %s53
      %s57 = sphi 0, %s56
      %s73 = sphi 0, %s57
      %s77 = sphi 0, %s77
      %s79 = sphi 0, %s77
      %s80 = sphi 0, %s79
      %s94 = sphi 0, %s80
      %s98 = sphi 0, %s98
      %s100 = sphi 0, %s98
      %s101 = sphi 0, %s100
      %s115 = sphi 0, %s101
      %s119 = sphi 0, %s119
      %s121 = sphi 0, %s119
      %s122 = sphi 0, %s121
      %s136 = sphi 0, %s122
      %s140 = sphi 0, %s140
      %s142 = sphi 0, %s140
      %s143 = sphi 0, %s142
      %s157 = sphi 0, %s143
      %s161 = sphi 0, %s161
      %s163 = sphi 0, %s161
      %s164 = sphi 0, %s163
      %s178 = sphi 0, %s164
      %s184 = sphi 0, %s186
      %s187 = sphi 0, %s184
      %s188 = sphi 0, %s187
      %s204 = sphi 0, %s188
    $region4: #{tpu_custom_call.1} parent=1 // loop_header_branch
      %20 = sbr.rel (%p18) target = $region8
    $region5: #{tpu_custom_call.1} parent=1 // loop_body
      %s22 = ssub.s32 %s17, 1
      %s23 = ssub.s32 %s17, 2
      %s24 = sadd.s32 %s17, 1
      %s25 = ssub.s32 %s17, %s24
      %p26 = scmp.eq.s32.totalorder %s25, 0
      %s28 = sadd.s32 %s27, 1
      %s29 = scalar_select %p26, %s27, %s28
      %p32 = pneg %p26
      %p33 = scmp.eq.s32.totalorder %s17, 1
      %p34 = por %p32, %p33
      %p35 = scmp.ne.s32.totalorder %s27, %s30
      %p36 = scmp.eq.s32.totalorder %s17, 0
      %p37 = por %p35, %p36
      %p38 = scmp.ne.s32.totalorder %s27, %s30
      %p39 = scmp.eq.s32.totalorder %s22, 1
      %p40 = por %p38, %p39
      %p41 = scmp.ne.s32.totalorder %s30, %s31
      %p42 = scmp.eq.s32.totalorder %s22, 0
      %p43 = por %p41, %p42
      %p44 = scmp.ne.s32.totalorder %s30, %s31
      %p45 = scmp.eq.s32.totalorder %s23, 1
      %p46 = por %p44, %p45
      %p48 = scmp.ne.s32.totalorder %s31, %s47
      %p49 = scmp.eq.s32.totalorder %s23, 0
      %p50 = por %p48, %p49
      %s51 = ssub.s32 %s17, %s24
      %p52 = scmp.eq.s32.totalorder %s51, 0
      %s54 = sadd.s32 %s53, 1
      %s55 = scalar_select %p52, %s53, %s54
      %p58 = pneg %p52
      %p59 = scmp.eq.s32.totalorder %s17, 1
      %p60 = por %p58, %p59
      %p61 = scmp.ne.s32.totalorder %s53, %s56
      %p62 = scmp.eq.s32.totalorder %s17, 0
      %p63 = por %p61, %p62
      %p64 = scmp.ne.s32.totalorder %s53, %s56
      %p65 = scmp.eq.s32.totalorder %s22, 1
      %p66 = por %p64, %p65
      %p67 = scmp.ne.s32.totalorder %s56, %s57
      %p68 = scmp.eq.s32.totalorder %s22, 0
      %p69 = por %p67, %p68
      %p70 = scmp.ne.s32.totalorder %s56, %s57
      %p71 = scmp.eq.s32.totalorder %s23, 1
      %p72 = por %p70, %p71
      %p74 = scmp.ne.s32.totalorder %s57, %s73
      %p75 = scmp.eq.s32.totalorder %s23, 0
      %p76 = por %p74, %p75
      %s78 = sadd.s32 %s77, 1
      %p81 = scmp.eq.s32.totalorder %s17, 1
      %p82 = scmp.ne.s32.totalorder %s77, %s79
      %p83 = scmp.eq.s32.totalorder %s17, 0
      %p84 = por %p82, %p83
      %p85 = scmp.ne.s32.totalorder %s77, %s79
      %p86 = scmp.eq.s32.totalorder %s22, 1
      %p87 = por %p85, %p86
      %p88 = scmp.ne.s32.totalorder %s79, %s80
      %p89 = scmp.eq.s32.totalorder %s22, 0
      %p90 = por %p88, %p89
      %p91 = scmp.ne.s32.totalorder %s79, %s80
      %p92 = scmp.eq.s32.totalorder %s23, 1
      %p93 = por %p91, %p92
      %p95 = scmp.ne.s32.totalorder %s80, %s94
      %p96 = scmp.eq.s32.totalorder %s23, 0
      %p97 = por %p95, %p96
      %s99 = sadd.s32 %s98, 1
      %p102 = scmp.eq.s32.totalorder %s17, 1
      %p103 = scmp.ne.s32.totalorder %s98, %s100
      %p104 = scmp.eq.s32.totalorder %s17, 0
      %p105 = por %p103, %p104
      %p106 = scmp.ne.s32.totalorder %s98, %s100
      %p107 = scmp.eq.s32.totalorder %s22, 1
      %p108 = por %p106, %p107
      %p109 = scmp.ne.s32.totalorder %s100, %s101
      %p110 = scmp.eq.s32.totalorder %s22, 0
      %p111 = por %p109, %p110
      %p112 = scmp.ne.s32.totalorder %s100, %s101
      %p113 = scmp.eq.s32.totalorder %s23, 1
      %p114 = por %p112, %p113
      %p116 = scmp.ne.s32.totalorder %s101, %s115
      %p117 = scmp.eq.s32.totalorder %s23, 0
      %p118 = por %p116, %p117
      %s120 = sadd.s32 %s119, 1
      %p123 = scmp.eq.s32.totalorder %s17, 1
      %p124 = scmp.ne.s32.totalorder %s119, %s121
      %p125 = scmp.eq.s32.totalorder %s17, 0
      %p126 = por %p124, %p125
      %p127 = scmp.ne.s32.totalorder %s119, %s121
      %p128 = scmp.eq.s32.totalorder %s22, 1
      %p129 = por %p127, %p128
      %p130 = scmp.ne.s32.totalorder %s121, %s122
      %p131 = scmp.eq.s32.totalorder %s22, 0
      %p132 = por %p130, %p131
      %p133 = scmp.ne.s32.totalorder %s121, %s122
      %p134 = scmp.eq.s32.totalorder %s23, 1
      %p135 = por %p133, %p134
      %p137 = scmp.ne.s32.totalorder %s122, %s136
      %p138 = scmp.eq.s32.totalorder %s23, 0
      %p139 = por %p137, %p138
      %s141 = sadd.s32 %s140, 1
      %p144 = scmp.eq.s32.totalorder %s17, 1
      %p145 = scmp.ne.s32.totalorder %s140, %s142
      %p146 = scmp.eq.s32.totalorder %s17, 0
      %p147 = por %p145, %p146
      %p148 = scmp.ne.s32.totalorder %s140, %s142
      %p149 = scmp.eq.s32.totalorder %s22, 1
      %p150 = por %p148, %p149
      %p151 = scmp.ne.s32.totalorder %s142, %s143
      %p152 = scmp.eq.s32.totalorder %s22, 0
      %p153 = por %p151, %p152
      %p154 = scmp.ne.s32.totalorder %s142, %s143
      %p155 = scmp.eq.s32.totalorder %s23, 1
      %p156 = por %p154, %p155
      %p158 = scmp.ne.s32.totalorder %s143, %s157
      %p159 = scmp.eq.s32.totalorder %s23, 0
      %p160 = por %p158, %p159
      %s162 = sadd.s32 %s161, 1
      %p165 = scmp.eq.s32.totalorder %s17, 1
      %p166 = scmp.ne.s32.totalorder %s161, %s163
      %p167 = scmp.eq.s32.totalorder %s17, 0
      %p168 = por %p166, %p167
      %p169 = scmp.ne.s32.totalorder %s161, %s163
      %p170 = scmp.eq.s32.totalorder %s22, 1
      %p171 = por %p169, %p170
      %p172 = scmp.ne.s32.totalorder %s163, %s164
      %p173 = scmp.eq.s32.totalorder %s22, 0
      %p174 = por %p172, %p173
      %p175 = scmp.ne.s32.totalorder %s163, %s164
      %p176 = scmp.eq.s32.totalorder %s23, 1
      %p177 = por %p175, %p176
      %p179 = scmp.ne.s32.totalorder %s164, %s178
      %p180 = scmp.eq.s32.totalorder %s23, 0
      %p181 = por %p179, %p180
      %s182 = ssub.s32 %s17, %s24
      %p183 = scmp.eq.s32.totalorder %s182, 0
      %s185 = sadd.s32 %s184, 1
      %s186 = scalar_select %p183, %s184, %s185
      %p189 = pneg %p183
      %p190 = scmp.eq.s32.totalorder %s17, 1
      %p191 = por %p189, %p190
      %p192 = scmp.ne.s32.totalorder %s184, %s187
      %p193 = scmp.eq.s32.totalorder %s17, 0
      %p194 = por %p192, %p193
      %p195 = scmp.ne.s32.totalorder %s184, %s187
      %p196 = scmp.eq.s32.totalorder %s22, 1
      %p197 = por %p195, %p196
      %p198 = scmp.ne.s32.totalorder %s187, %s188
      %p199 = scmp.eq.s32.totalorder %s22, 0
      %p200 = por %p198, %p199
      %p201 = scmp.ne.s32.totalorder %s187, %s188
      %p202 = scmp.eq.s32.totalorder %s23, 1
      %p203 = por %p201, %p202
      %p205 = scmp.ne.s32.totalorder %s188, %s204
      %p206 = scmp.eq.s32.totalorder %s23, 0
      %p207 = por %p205, %p206
      %p208 = scmp.le.s32.totalorder 1, %s17
      %p209 = scmp.lt.s32.totalorder %s17, 3
      %p210 = pnand %p208, %p209
      %p211 = pneg %p210
      // Predicated region
      $region9: #{tpu_custom_call.1} parent=5 // pred_check
        _
      $region10: #{tpu_custom_call.1} parent=5 // pred_check_branch
        %213 = sbr.rel (%p210) target = $region12
      $region11: #{tpu_custom_call.1} parent=5 // pred_region
        %s214 = ssub.s32 %s17, 1
        // Predicated region
        $region13: #{tpu_custom_call.1} parent=11 // pred_check
          %p215 = pneg %p90
        $region14: #{tpu_custom_call.1} parent=11 // pred_check_branch
          %217 = sbr.rel (%p215) target = $region16
        $region15: #{tpu_custom_call.1} parent=11 // pred_region
          _
        $region16: #{tpu_custom_call.1} parent=11 // pred_fallthru
          _
        // Predicated region
        $region17: #{tpu_custom_call.1} parent=11 // pred_check
          %p218 = pneg %p111
        $region18: #{tpu_custom_call.1} parent=11 // pred_check_branch
          %220 = sbr.rel (%p218) target = $region20
        $region19: #{tpu_custom_call.1} parent=11 // pred_region
          _
        $region20: #{tpu_custom_call.1} parent=11 // pred_fallthru
          _
        // Predicated region
        $region21: #{tpu_custom_call.1} parent=11 // pred_check
          %p221 = pneg %p132
        $region22: #{tpu_custom_call.1} parent=11 // pred_check_branch
          %223 = sbr.rel (%p221) target = $region24
        $region23: #{tpu_custom_call.1} parent=11 // pred_region
          _
        $region24: #{tpu_custom_call.1} parent=11 // pred_fallthru
          _
        // Predicated region
        $region25: #{tpu_custom_call.1} parent=11 // pred_check
          %p224 = pneg %p153
        $region26: #{tpu_custom_call.1} parent=11 // pred_check_branch
          %226 = sbr.rel (%p224) target = $region28
        $region27: #{tpu_custom_call.1} parent=11 // pred_region
          _
        $region28: #{tpu_custom_call.1} parent=11 // pred_fallthru
          _
        // Predicated region
        $region29: #{tpu_custom_call.1} parent=11 // pred_check
          %p227 = pneg %p174
        $region30: #{tpu_custom_call.1} parent=11 // pred_check_branch
          %229 = sbr.rel (%p227) target = $region32
        $region31: #{tpu_custom_call.1} parent=11 // pred_region
          _
        $region32: #{tpu_custom_call.1} parent=11 // pred_fallthru
          _
      $region12: #{tpu_custom_call.1} parent=5 // pred_fallthru
        _
      %p230 = scmp.lt.s32.totalorder %s17, 2
      // Predicated region
      $region33: #{tpu_custom_call.1} parent=5 // pred_check
        %p231 = pneg %p230
      $region34: #{tpu_custom_call.1} parent=5 // pred_check_branch
        %233 = sbr.rel (%p231) target = $region36
      $region35: #{tpu_custom_call.1} parent=5 // pred_region
        // Predicated region
        $region37: #{tpu_custom_call.1} parent=35 // pred_check
          %p234 = pneg %p37
        $region38: #{tpu_custom_call.1} parent=35 // pred_check_branch
          %236 = sbr.rel (%p234) target = $region40
        $region39: #{tpu_custom_call.1} parent=35 // pred_region
          %s237 = smul.u32 16, %s17
          %p238 = scmp.lt.s32.totalorder %s237, 31
          %s239 = scalar_select %p238, %s237, 31
          %s240 = smul.addr %s239, 8
          %s241 = scalar_lea.vmem %s0, %s240
          %s242 = smul.u32 16, %s17
        $region40: #{tpu_custom_call.1} parent=35 // pred_fallthru
          _
        // Predicated region
        $region41: #{tpu_custom_call.1} parent=35 // pred_check
          %p243 = pneg %p63
        $region42: #{tpu_custom_call.1} parent=35 // pred_check_branch
          %245 = sbr.rel (%p243) target = $region44
        $region43: #{tpu_custom_call.1} parent=35 // pred_region
          %s246 = smul.u32 16, %s17
          %p247 = scmp.lt.s32.totalorder %s246, 31
          %s248 = scalar_select %p247, %s246, 31
          %s249 = smul.addr %s248, 8
          %s250 = scalar_lea.vmem %s1, %s249
          %s251 = smul.u32 16, %s17
        $region44: #{tpu_custom_call.1} parent=35 // pred_fallthru
          _
      $region36: #{tpu_custom_call.1} parent=5 // pred_fallthru
        _
      %p252 = scmp.le.s32.totalorder 1, %s17
      %p253 = scmp.lt.s32.totalorder %s17, 3
      %p254 = pnand %p252, %p253
      %p255 = pneg %p254
      // Predicated region
      $region45: #{tpu_custom_call.1} parent=5 // pred_check
        _
      $region46: #{tpu_custom_call.1} parent=5 // pred_check_branch
        %257 = sbr.rel (%p254) target = $region48
      $region47: #{tpu_custom_call.1} parent=5 // pred_region
        %s258 = ssub.s32 %s17, 1
        %s259 = smul.u32 16, %s22
        %p260 = scmp.lt.s32.totalorder %s259, 31
        %s261 = scalar_select %p260, %s259, 31
        %s262 = smul.addr %s261, 8
        %s263 = scalar_lea.vmem %s0, %s262
        %p264 = pneg %p43
        %p265 = pneg %p40
        %s266 = smul.u32 16, %s22
        %p267 = scmp.lt.s32.totalorder %s266, 31
        %s268 = scalar_select %p267, %s266, 31
        %s269 = smul.addr %s268, 8
        %s270 = scalar_lea.vmem %s1, %s269
        %p271 = pneg %p69
        %p272 = pneg %p66
        %p273 = pneg %p90
        %p274 = pneg %p87
        %p275 = pneg %p111
        %p276 = pneg %p108
        %p277 = pneg %p132
        %p278 = pneg %p129
        %p279 = pneg %p153
        %p280 = pneg %p150
        %p281 = pneg %p174
        %p282 = pneg %p171
        %p283 = pneg %p200
        %p284 = pneg %p197
        %s285 = sand.u32 %s187, 1
        %s286 = scalar_lea.sflag [#allocation4], %s285
        %s287 = sand.u32 %s187, 1
        %s288 = scalar_lea.vmem [#allocation3], %s287
        %s289 = smul.u32 16, %s22
        %p290 = scmp.lt.s32.totalorder %s289, 31
        %s291 = scalar_select %p290, %s289, 31
        %s292 = smul.addr %s291, 8
        %s293 = scalar_lea.vmem %s0, %s292
        %s294 = smul.u32 16, %s22
        %s295 = smul.u32 16, %s22
        %p296 = scmp.lt.s32.totalorder %s295, 31
        %s297 = scalar_select %p296, %s295, 31
        %s298 = smul.addr %s297, 8
        %s299 = scalar_lea.vmem %s1, %s298
        %s300 = smul.u32 16, %s22
        %v301 = vld [vmem:[%s293] sm:$0xff]
        %v302 = vld [vmem:[%s293 + $0x8] sm:$0xff]
        %v303 = vld [vmem:[%s293 + $0x10] sm:$0xff]
        %v304 = vld [vmem:[%s293 + $0x18] sm:$0xff]
        %v305 = vld [vmem:[%s293 + $0x20] sm:$0xff]
        %v306 = vld [vmem:[%s293 + $0x28] sm:$0xff]
        %v307 = vld [vmem:[%s293 + $0x30] sm:$0xff]
        %v308 = vld [vmem:[%s293 + $0x38] sm:$0xff]
        %v309 = vld [vmem:[%s293 + $0x40] sm:$0xff]
        %v310 = vld [vmem:[%s293 + $0x48] sm:$0xff]
        %v311 = vld [vmem:[%s293 + $0x50] sm:$0xff]
        %v312 = vld [vmem:[%s293 + $0x58] sm:$0xff]
        %v313 = vld [vmem:[%s293 + $0x60] sm:$0xff]
        %v314 = vld [vmem:[%s293 + $0x68] sm:$0xff]
        %v315 = vld [vmem:[%s293 + $0x70] sm:$0xff]
        %v316 = vld [vmem:[%s293 + $0x78] sm:$0xff]
        %v317 = vld [vmem:[%s2] sm:$0xff]
        %v318 = vld [vmem:[%s2 + $0x8] sm:$0xff]
        %v319 = vld [vmem:[%s2 + $0x10] sm:$0xff]
        %v320 = vld [vmem:[%s2 + $0x18] sm:$0xff]
        %v321 = vld [vmem:[%s299] sm:$0xff]
        %v322 = vld [vmem:[%s299 + $0x8] sm:$0xff]
        %v323 = vld [vmem:[%s299 + $0x10] sm:$0xff]
        %v324 = vld [vmem:[%s299 + $0x18] sm:$0xff]
        %v325 = vld [vmem:[%s299 + $0x20] sm:$0xff]
        %v326 = vld [vmem:[%s299 + $0x28] sm:$0xff]
        %v327 = vld [vmem:[%s299 + $0x30] sm:$0xff]
        %v328 = vld [vmem:[%s299 + $0x38] sm:$0xff]
        %v329 = vld [vmem:[%s299 + $0x40] sm:$0xff]
        %v330 = vld [vmem:[%s299 + $0x48] sm:$0xff]
        %v331 = vld [vmem:[%s299 + $0x50] sm:$0xff]
        %v332 = vld [vmem:[%s299 + $0x58] sm:$0xff]
        %v333 = vld [vmem:[%s299 + $0x60] sm:$0xff]
        %v334 = vld [vmem:[%s299 + $0x68] sm:$0xff]
        %v335 = vld [vmem:[%s299 + $0x70] sm:$0xff]
        %v336 = vld [vmem:[%s299 + $0x78] sm:$0xff]
        %v337 = vld [vmem:[%s3] sm:$0xff]
        %v338 = vld [vmem:[%s3 + $0x8] sm:$0xff]
        %v339 = vld [vmem:[%s3 + $0x10] sm:$0xff]
        %v340 = vld [vmem:[%s3 + $0x18] sm:$0xff]
        %vm341 = vcmask 261120
        %v343 = vsel %vm341, %v321, 0
        %v346 = vsel %vm341, %v322, 0
        %v349 = vsel %vm341, %v323, 0
        %v352 = vsel %vm341, %v324, 0
        %v355 = vsel %vm341, %v325, 0
        %v358 = vsel %vm341, %v326, 0
        %v361 = vsel %vm341, %v327, 0
        %v364 = vsel %vm341, %v328, 0
        %v367 = vsel %vm341, %v329, 0
        %v370 = vsel %vm341, %v330, 0
        %v373 = vsel %vm341, %v331, 0
        %v376 = vsel %vm341, %v332, 0
        %v379 = vsel %vm341, %v333, 0
        %v382 = vsel %vm341, %v334, 0
        %v385 = vsel %vm341, %v335, 0
        %v388 = vsel %vm341, %v336, 0
        %390 = vmatprep.subr.mxu0 0.0
        %391 = vmatpush1.msra.mxu0 %v337
        %392 = vmatprep.subr.mxu0 0.0
        %393 = vmatpush1.msra.mxu0 %v338
        %394 = vmatprep.subr.mxu0 0.0
        %395 = vmatpush1.msra.mxu0 %v339
        %396 = vmatprep.subr.mxu0 0.0
        %397 = vmatpush1.msra.mxu0 %v340
        %398 = vmatprep.subr.mxu0 0.0
        %399 = vmatpush1.msra.mxu0 0.0
        %400 = vmatprep.subr.mxu0 0.0
        %401 = vmatpush1.msra.mxu0 0.0
        %402 = vmatprep.subr.mxu0 0.0
        %403 = vmatpush1.msra.mxu0 0.0
        %404 = vmatprep.subr.mxu0 0.0
        %405 = vmatpush1.msra.mxu0 0.0
        %406 = vmatprep.subr.mxu0 0.0
        %407 = vmatpush1.msra.mxu0 0.0
        %408 = vmatprep.subr.mxu0 0.0
        %409 = vmatpush1.msra.mxu0 0.0
        %410 = vmatprep.subr.mxu0 0.0
        %411 = vmatpush1.msra.mxu0 0.0
        %412 = vmatprep.subr.mxu0 0.0
        %413 = vmatpush1.msra.mxu0 0.0
        %414 = vmatprep.subr.mxu0 0.0
        %415 = vmatpush1.msra.mxu0 0.0
        %416 = vmatprep.subr.mxu0 0.0
        %417 = vmatpush1.msra.mxu0 0.0
        %418 = vmatprep.subr.mxu0 0.0
        %419 = vmatpush1.msra.mxu0 0.0
        %420 = vmatprep.subr.mxu0 0.0
        %421 = vmatpush1.msra.mxu0 0.0
        %422 = vmatprep.subr.mxu0 0.0
        %423 = vmatpush1.msra.mxu0 0.0
        %424 = vmatprep.subr.mxu0 0.0
        %425 = vmatpush1.msra.mxu0 0.0
        %426 = vmatprep.subr.mxu0 0.0
        %427 = vmatpush1.msra.mxu0 0.0
        %428 = vmatprep.subr.mxu0 0.0
        %429 = vmatpush1.msra.mxu0 0.0
        %430 = vmatprep.subr.mxu0 0.0
        %431 = vmatpush1.msra.mxu0 0.0
        %432 = vmatprep.subr.mxu0 0.0
        %433 = vmatpush1.msra.mxu0 0.0
        %434 = vmatprep.subr.mxu0 0.0
        %435 = vmatpush1.msra.mxu0 0.0
        %436 = vmatprep.subr.mxu0 0.0
        %437 = vmatpush1.msra.mxu0 0.0
        %438 = vmatprep.subr.mxu0 0.0
        %439 = vmatpush1.msra.mxu0 0.0
        %440 = vmatprep.subr.mxu0 0.0
        %441 = vmatpush1.msra.mxu0 0.0
        %442 = vmatprep.subr.mxu0 0.0
        %443 = vmatpush1.msra.mxu0 0.0
        %444 = vmatprep.subr.mxu0 0.0
        %445 = vmatpush1.msra.mxu0 0.0
        %446 = vmatprep.subr.mxu0 0.0
        %447 = vmatpush1.msra.mxu0 0.0
        %448 = vmatprep.subr.mxu0 0.0
        %449 = vmatpush1.msra.mxu0 0.0
        %450 = vmatprep.subr.mxu0 0.0
        %451 = vmatpush1.msra.mxu0 0.0
        %452 = vmatprep.subr.mxu0 0.0
        %453 = vmatpush1.msra.mxu0 0.0
        %454 = vmatprep.mubr.f32.mxu0 0.0
        %455 = vmatmul.mubr.f32.gmra.mrb[0].mxu0 %v343
        %v456 = vpop.f32.mrb[0].mxu0
        %v457 = vadd.f32 0.0, %v456
        %v458 = vpop.f32.mrb[0].mxu0
        %459 = vmatprep.mubr.f32.mxu0 0.0
        %460 = vmatmul.mubr.f32.gmra.mrb[0].mxu0 %v346
        %v461 = vpop.f32.mrb[0].mxu0
        %v462 = vadd.f32 0.0, %v461
        %v463 = vpop.f32.mrb[0].mxu0
        %464 = vmatprep.mubr.f32.mxu0 0.0
        %465 = vmatmul.mubr.f32.gmra.mrb[0].mxu0 %v349
        %v466 = vpop.f32.mrb[0].mxu0
        %v467 = vadd.f32 0.0, %v466
        %v468 = vpop.f32.mrb[0].mxu0
        %469 = vmatprep.mubr.f32.mxu0 0.0
        %470 = vmatmul.mubr.f32.gmra.mrb[0].mxu0 %v352
        %v471 = vpop.f32.mrb[0].mxu0
        %v472 = vadd.f32 0.0, %v471
        %v473 = vpop.f32.mrb[0].mxu0
        %474 = vmatprep.mubr.f32.mxu0 0.0
        %475 = vmatmul.mubr.f32.gmra.mrb[0].mxu0 %v355
        %v476 = vpop.f32.mrb[0].mxu0
        %v477 = vadd.f32 0.0, %v476
        %v478 = vpop.f32.mrb[0].mxu0
        %479 = vmatprep.mubr.f32.mxu0 0.0
        %480 = vmatmul.mubr.f32.gmra.mrb[0].mxu0 %v358
        %v481 = vpop.f32.mrb[0].mxu0
        %v482 = vadd.f32 0.0, %v481
        %v483 = vpop.f32.mrb[0].mxu0
        %484 = vmatprep.mubr.f32.mxu0 0.0
        %485 = vmatmul.mubr.f32.gmra.mrb[0].mxu0 %v361
        %v486 = vpop.f32.mrb[0].mxu0
        %v487 = vadd.f32 0.0, %v486
        %v488 = vpop.f32.mrb[0].mxu0
        %489 = vmatprep.mubr.f32.mxu0 0.0
        %490 = vmatmul.mubr.f32.gmra.mrb[0].mxu0 %v364
        %v491 = vpop.f32.mrb[0].mxu0
        %v492 = vadd.f32 0.0, %v491
        %v493 = vpop.f32.mrb[0].mxu0
        %494 = vmatprep.mubr.f32.mxu0 0.0
        %495 = vmatmul.mubr.f32.gmra.mrb[0].mxu0 %v367
        %v496 = vpop.f32.mrb[0].mxu0
        %v497 = vadd.f32 0.0, %v496
        %v498 = vpop.f32.mrb[0].mxu0
        %499 = vmatprep.mubr.f32.mxu0 0.0
        %500 = vmatmul.mubr.f32.gmra.mrb[0].mxu0 %v370
        %v501 = vpop.f32.mrb[0].mxu0
        %v502 = vadd.f32 0.0, %v501
        %v503 = vpop.f32.mrb[0].mxu0
        %504 = vmatprep.mubr.f32.mxu0 0.0
        %505 = vmatmul.mubr.f32.gmra.mrb[0].mxu0 %v373
        %v506 = vpop.f32.mrb[0].mxu0
        %v507 = vadd.f32 0.0, %v506
        %v508 = vpop.f32.mrb[0].mxu0
        %509 = vmatprep.mubr.f32.mxu0 0.0
        %510 = vmatmul.mubr.f32.gmra.mrb[0].mxu0 %v376
        %v511 = vpop.f32.mrb[0].mxu0
        %v512 = vadd.f32 0.0, %v511
        %v513 = vpop.f32.mrb[0].mxu0
        %514 = vmatprep.mubr.f32.mxu0 0.0
        %515 = vmatmul.mubr.f32.gmra.mrb[0].mxu0 %v379
        %v516 = vpop.f32.mrb[0].mxu0
        %v517 = vadd.f32 0.0, %v516
        %v518 = vpop.f32.mrb[0].mxu0
        %519 = vmatprep.mubr.f32.mxu0 0.0
        %520 = vmatmul.mubr.f32.gmra.mrb[0].mxu0 %v382
        %v521 = vpop.f32.mrb[0].mxu0
        %v522 = vadd.f32 0.0, %v521
        %v523 = vpop.f32.mrb[0].mxu0
        %524 = vmatprep.mubr.f32.mxu0 0.0
        %525 = vmatmul.mubr.f32.gmra.mrb[0].mxu0 %v385
        %v526 = vpop.f32.mrb[0].mxu0
        %v527 = vadd.f32 0.0, %v526
        %v528 = vpop.f32.mrb[0].mxu0
        %529 = vmatprep.mubr.f32.mxu0 0.0
        %530 = vmatmul.mubr.f32.gmra.mrb[0].mxu0 %v388
        %v531 = vpop.f32.mrb[0].mxu0
        %v532 = vadd.f32 0.0, %v531
        %v533 = vpop.f32.mrb[0].mxu0
        %534 = vdwg.mxu0
        %v536 = vsel %vm341, %v301, 0
        %v539 = vsel %vm341, %v302, 0
        %v542 = vsel %vm341, %v303, 0
        %v545 = vsel %vm341, %v304, 0
        %v548 = vsel %vm341, %v305, 0
        %v551 = vsel %vm341, %v306, 0
        %v554 = vsel %vm341, %v307, 0
        %v557 = vsel %vm341, %v308, 0
        %v560 = vsel %vm341, %v309, 0
        %v563 = vsel %vm341, %v310, 0
        %v566 = vsel %vm341, %v311, 0
        %v569 = vsel %vm341, %v312, 0
        %v572 = vsel %vm341, %v313, 0
        %v575 = vsel %vm341, %v314, 0
        %v578 = vsel %vm341, %v315, 0
        %v581 = vsel %vm341, %v316, 0
        %583 = vmatprep.subr.mxu0 0.0
        %584 = vmatpush1.msra.mxu0 %v317
        %585 = vmatprep.subr.mxu0 0.0
        %586 = vmatpush1.msra.mxu0 %v318
        %587 = vmatprep.subr.mxu0 0.0
        %588 = vmatpush1.msra.mxu0 %v319
        %589 = vmatprep.subr.mxu0 0.0
        %590 = vmatpush1.msra.mxu0 %v320
        %591 = vmatprep.subr.mxu0 0.0
        %592 = vmatpush1.msra.mxu0 0.0
        %593 = vmatprep.subr.mxu0 0.0
        %594 = vmatpush1.msra.mxu0 0.0
        %595 = vmatprep.subr.mxu0 0.0
        %596 = vmatpush1.msra.mxu0 0.0
        %597 = vmatprep.subr.mxu0 0.0
        %598 = vmatpush1.msra.mxu0 0.0
        %599 = vmatprep.subr.mxu0 0.0
        %600 = vmatpush1.msra.mxu0 0.0
        %601 = vmatprep.subr.mxu0 0.0
        %602 = vmatpush1.msra.mxu0 0.0
        %603 = vmatprep.subr.mxu0 0.0
        %604 = vmatpush1.msra.mxu0 0.0
        %605 = vmatprep.subr.mxu0 0.0
        %606 = vmatpush1.msra.mxu0 0.0
        %607 = vmatprep.subr.mxu0 0.0
        %608 = vmatpush1.msra.mxu0 0.0
        %609 = vmatprep.subr.mxu0 0.0
        %610 = vmatpush1.msra.mxu0 0.0
        %611 = vmatprep.subr.mxu0 0.0
        %612 = vmatpush1.msra.mxu0 0.0
        %613 = vmatprep.subr.mxu0 0.0
        %614 = vmatpush1.msra.mxu0 0.0
        %615 = vmatprep.subr.mxu0 0.0
        %616 = vmatpush1.msra.mxu0 0.0
        %617 = vmatprep.subr.mxu0 0.0
        %618 = vmatpush1.msra.mxu0 0.0
        %619 = vmatprep.subr.mxu0 0.0
        %620 = vmatpush1.msra.mxu0 0.0
        %621 = vmatprep.subr.mxu0 0.0
        %622 = vmatpush1.msra.mxu0 0.0
        %623 = vmatprep.subr.mxu0 0.0
        %624 = vmatpush1.msra.mxu0 0.0
        %625 = vmatprep.subr.mxu0 0.0
        %626 = vmatpush1.msra.mxu0 0.0
        %627 = vmatprep.subr.mxu0 0.0
        %628 = vmatpush1.msra.mxu0 0.0
        %629 = vmatprep.subr.mxu0 0.0
        %630 = vmatpush1.msra.mxu0 0.0
        %631 = vmatprep.subr.mxu0 0.0
        %632 = vmatpush1.msra.mxu0 0.0
        %633 = vmatprep.subr.mxu0 0.0
        %634 = vmatpush1.msra.mxu0 0.0
        %635 = vmatprep.subr.mxu0 0.0
        %636 = vmatpush1.msra.mxu0 0.0
        %637 = vmatprep.subr.mxu0 0.0
        %638 = vmatpush1.msra.mxu0 0.0
        %639 = vmatprep.subr.mxu0 0.0
        %640 = vmatpush1.msra.mxu0 0.0
        %641 = vmatprep.subr.mxu0 0.0
        %642 = vmatpush1.msra.mxu0 0.0
        %643 = vmatprep.subr.mxu0 0.0
        %644 = vmatpush1.msra.mxu0 0.0
        %645 = vmatprep.subr.mxu0 0.0
        %646 = vmatpush1.msra.mxu0 0.0
        %647 = vmatprep.mubr.f32.mxu0 0.0
        %648 = vmatmul.mubr.f32.gmra.mrb[0].mxu0 %v536
        %v649 = vpop.f32.mrb[0].mxu0
        %v650 = vadd.f32 %v457, %v649
        %v651 = vpop.f32.mrb[0].mxu0
        %652 = vmatprep.mubr.f32.mxu0 0.0
        %653 = vmatmul.mubr.f32.gmra.mrb[0].mxu0 %v539
        %v654 = vpop.f32.mrb[0].mxu0
        %v655 = vadd.f32 %v462, %v654
        %v656 = vpop.f32.mrb[0].mxu0
        %657 = vmatprep.mubr.f32.mxu0 0.0
        %658 = vmatmul.mubr.f32.gmra.mrb[0].mxu0 %v542
        %v659 = vpop.f32.mrb[0].mxu0
        %v660 = vadd.f32 %v467, %v659
        %v661 = vpop.f32.mrb[0].mxu0
        %662 = vmatprep.mubr.f32.mxu0 0.0
        %663 = vmatmul.mubr.f32.gmra.mrb[0].mxu0 %v545
        %v664 = vpop.f32.mrb[0].mxu0
        %v665 = vadd.f32 %v472, %v664
        %v666 = vpop.f32.mrb[0].mxu0
        %667 = vmatprep.mubr.f32.mxu0 0.0
        %668 = vmatmul.mubr.f32.gmra.mrb[0].mxu0 %v548
        %v669 = vpop.f32.mrb[0].mxu0
        %v670 = vadd.f32 %v477, %v669
        %v671 = vpop.f32.mrb[0].mxu0
        %672 = vmatprep.mubr.f32.mxu0 0.0
        %673 = vmatmul.mubr.f32.gmra.mrb[0].mxu0 %v551
        %v674 = vpop.f32.mrb[0].mxu0
        %v675 = vadd.f32 %v482, %v674
        %v676 = vpop.f32.mrb[0].mxu0
        %677 = vmatprep.mubr.f32.mxu0 0.0
        %678 = vmatmul.mubr.f32.gmra.mrb[0].mxu0 %v554
        %v679 = vpop.f32.mrb[0].mxu0
        %v680 = vadd.f32 %v487, %v679
        %v681 = vpop.f32.mrb[0].mxu0
        %682 = vmatprep.mubr.f32.mxu0 0.0
        %683 = vmatmul.mubr.f32.gmra.mrb[0].mxu0 %v557
        %v684 = vpop.f32.mrb[0].mxu0
        %v685 = vadd.f32 %v492, %v684
        %v686 = vpop.f32.mrb[0].mxu0
        %687 = vmatprep.mubr.f32.mxu0 0.0
        %688 = vmatmul.mubr.f32.gmra.mrb[0].mxu0 %v560
        %v689 = vpop.f32.mrb[0].mxu0
        %v690 = vadd.f32 %v497, %v689
        %v691 = vpop.f32.mrb[0].mxu0
        %692 = vmatprep.mubr.f32.mxu0 0.0
        %693 = vmatmul.mubr.f32.gmra.mrb[0].mxu0 %v563
        %v694 = vpop.f32.mrb[0].mxu0
        %v695 = vadd.f32 %v502, %v694
        %v696 = vpop.f32.mrb[0].mxu0
        %697 = vmatprep.mubr.f32.mxu0 0.0
        %698 = vmatmul.mubr.f32.gmra.mrb[0].mxu0 %v566
        %v699 = vpop.f32.mrb[0].mxu0
        %v700 = vadd.f32 %v507, %v699
        %v701 = vpop.f32.mrb[0].mxu0
        %702 = vmatprep.mubr.f32.mxu0 0.0
        %703 = vmatmul.mubr.f32.gmra.mrb[0].mxu0 %v569
        %v704 = vpop.f32.mrb[0].mxu0
        %v705 = vadd.f32 %v512, %v704
        %v706 = vpop.f32.mrb[0].mxu0
        %707 = vmatprep.mubr.f32.mxu0 0.0
        %708 = vmatmul.mubr.f32.gmra.mrb[0].mxu0 %v572
        %v709 = vpop.f32.mrb[0].mxu0
        %v710 = vadd.f32 %v517, %v709
        %v711 = vpop.f32.mrb[0].mxu0
        %712 = vmatprep.mubr.f32.mxu0 0.0
        %713 = vmatmul.mubr.f32.gmra.mrb[0].mxu0 %v575
        %v714 = vpop.f32.mrb[0].mxu0
        %v715 = vadd.f32 %v522, %v714
        %v716 = vpop.f32.mrb[0].mxu0
        %717 = vmatprep.mubr.f32.mxu0 0.0
        %718 = vmatmul.mubr.f32.gmra.mrb[0].mxu0 %v578
        %v719 = vpop.f32.mrb[0].mxu0
        %v720 = vadd.f32 %v527, %v719
        %v721 = vpop.f32.mrb[0].mxu0
        %722 = vmatprep.mubr.f32.mxu0 0.0
        %723 = vmatmul.mubr.f32.gmra.mrb[0].mxu0 %v581
        %v724 = vpop.f32.mrb[0].mxu0
        %v725 = vadd.f32 %v532, %v724
        %v726 = vpop.f32.mrb[0].mxu0
        %727 = vdwg.mxu0
        %v728 = vld [vmem:[%s4] sm:$0x1]
        %v730 = vlaneseq
        %v731 = vshrl.u32 %v730, 7
        %v732 = vsub.s32 0, %v731
        %v733 = vrot.slane %v728, %v732
        %v735 = vadd.f32 %v650, %v733
        %v736 = vadd.f32 %v655, %v733
        %v737 = vadd.f32 %v660, %v733
        %v738 = vadd.f32 %v665, %v733
        %v739 = vadd.f32 %v670, %v733
        %v740 = vadd.f32 %v675, %v733
        %v741 = vadd.f32 %v680, %v733
        %v742 = vadd.f32 %v685, %v733
        %v743 = vadd.f32 %v690, %v733
        %v744 = vadd.f32 %v695, %v733
        %v745 = vadd.f32 %v700, %v733
        %v746 = vadd.f32 %v705, %v733
        %v747 = vadd.f32 %v710, %v733
        %v748 = vadd.f32 %v715, %v733
        %v749 = vadd.f32 %v720, %v733
        %v750 = vadd.f32 %v725, %v733
        %v751 = vmax.f32 %v735, 0.0
        %v752 = vmax.f32 %v736, 0.0
        %v753 = vmax.f32 %v737, 0.0
        %v754 = vmax.f32 %v738, 0.0
        %v755 = vmax.f32 %v739, 0.0
        %v756 = vmax.f32 %v740, 0.0
        %v757 = vmax.f32 %v741, 0.0
        %v758 = vmax.f32 %v742, 0.0
        %v759 = vmax.f32 %v743, 0.0
        %v760 = vmax.f32 %v744, 0.0
        %v761 = vmax.f32 %v745, 0.0
        %v762 = vmax.f32 %v746, 0.0
        %v763 = vmax.f32 %v747, 0.0
        %v764 = vmax.f32 %v748, 0.0
        %v765 = vmax.f32 %v749, 0.0
        %v766 = vmax.f32 %v750, 0.0
        %v767 = vld [vmem:[%s5] sm:$0x1]
        %s768 = sld [smem:[#allocation2]]
        %v769 = vstv %s768
        %770 = vmatprep.subr.mxu0 0.0
        %771 = vmatpush1.xpose.msra.mxu0 %v751
        %772 = vmatprep.subr.mxu0 0.0
        %773 = vmatpush1.xpose.msra.mxu0 %v752
        %774 = vmatprep.subr.mxu0 0.0
        %775 = vmatpush1.xpose.msra.mxu0 %v753
        %776 = vmatprep.subr.mxu0 0.0
        %777 = vmatpush1.xpose.msra.mxu0 %v754
        %778 = vmatprep.subr.mxu0 0.0
        %779 = vmatpush1.xpose.msra.mxu0 %v755
        %780 = vmatprep.subr.mxu0 0.0
        %781 = vmatpush1.xpose.msra.mxu0 %v756
        %782 = vmatprep.subr.mxu0 0.0
        %783 = vmatpush1.xpose.msra.mxu0 %v757
        %784 = vmatprep.subr.mxu0 0.0
        %785 = vmatpush1.xpose.msra.mxu0 %v758
        %786 = vmatprep.subr.mxu0 0.0
        %787 = vmatpush1.xpose.msra.mxu0 %v759
        %788 = vmatprep.subr.mxu0 0.0
        %789 = vmatpush1.xpose.msra.mxu0 %v760
        %790 = vmatprep.subr.mxu0 0.0
        %791 = vmatpush1.xpose.msra.mxu0 %v761
        %792 = vmatprep.subr.mxu0 0.0
        %793 = vmatpush1.xpose.msra.mxu0 %v762
        %794 = vmatprep.subr.mxu0 0.0
        %795 = vmatpush1.xpose.msra.mxu0 %v763
        %796 = vmatprep.subr.mxu0 0.0
        %797 = vmatpush1.xpose.msra.mxu0 %v764
        %798 = vmatprep.subr.mxu0 0.0
        %799 = vmatpush1.xpose.msra.mxu0 %v765
        %800 = vmatprep.subr.mxu0 0.0
        %801 = vmatpush1.xpose.msra.mxu0 %v766
        %802 = vmatprep.subr.mxu0 0.0
        %803 = vmatpush1.xpose.msra.mxu0 0.0
        %804 = vmatprep.subr.mxu0 0.0
        %805 = vmatpush1.xpose.msra.mxu0 0.0
        %806 = vmatprep.subr.mxu0 0.0
        %807 = vmatpush1.xpose.msra.mxu0 0.0
        %808 = vmatprep.subr.mxu0 0.0
        %809 = vmatpush1.xpose.msra.mxu0 0.0
        %810 = vmatprep.subr.mxu0 0.0
        %811 = vmatpush1.xpose.msra.mxu0 0.0
        %812 = vmatprep.subr.mxu0 0.0
        %813 = vmatpush1.xpose.msra.mxu0 0.0
        %814 = vmatprep.subr.mxu0 0.0
        %815 = vmatpush1.xpose.msra.mxu0 0.0
        %816 = vmatprep.subr.mxu0 0.0
        %817 = vmatpush1.xpose.msra.mxu0 0.0
        %818 = vmatprep.subr.mxu0 0.0
        %819 = vmatpush1.xpose.msra.mxu0 0.0
        %820 = vmatprep.subr.mxu0 0.0
        %821 = vmatpush1.xpose.msra.mxu0 0.0
        %822 = vmatprep.subr.mxu0 0.0
        %823 = vmatpush1.xpose.msra.mxu0 0.0
        %824 = vmatprep.subr.mxu0 0.0
        %825 = vmatpush1.xpose.msra.mxu0 0.0
        %826 = vmatprep.subr.mxu0 0.0
        %827 = vmatpush1.xpose.msra.mxu0 0.0
        %828 = vmatprep.subr.mxu0 0.0
        %829 = vmatpush1.xpose.msra.mxu0 0.0
        %830 = vmatprep.subr.mxu0 0.0
        %831 = vmatpush1.xpose.msra.mxu0 0.0
        %832 = vmatprep.subr.mxu0 0.0
        %833 = vmatpush1.xpose.msra.mxu0 0.0
        %834 = vmatprep.mubr.f32.mxu0 0.0
        %835 = vmatmul.mubr.f32.gmra.mrb[0].mxu0 %v767
        %v836 = vpop.f32.mrb[0].mxu0
        %v837 = vadd.f32 %v769, %v836
        %v838 = vpop.f32.mrb[0].mxu0
        %839 = vdwg.mxu0
        %840 = vst [vmem:[%s288] sm:$0x1] %v837
        %s841 = sand.u32 %s187, 1
        %s842 = scalar_lea.sflag [#allocation4], %s841
        %s843 = sand.u32 %s187, 1
        %s844 = scalar_lea.vmem [#allocation3], %s843
        // Predicated region
        $region49: #{tpu_custom_call.1} parent=47 // pred_check
          %p845 = pneg %p197
        $region50: #{tpu_custom_call.1} parent=47 // pred_check_branch
          %847 = sbr.rel (%p845) target = $region52
        $region51: #{tpu_custom_call.1} parent=47 // pred_region
          %s849 = ssub.s32 16, 16
          %850 = vsyncadd %s842, %s849
          %s851 = smul.addr %s22, 16
          %s852 = scalar_lea.hbm %s7, %s851
          %s854 = sshll.u32 %s844, 4
          %s855 = int_to_ptr.vmem [resolvable:$true] %s854
          %857 = dma.vmem_to_hbm [thread:$0]  %s855, 16, %s852, %s842
        $region52: #{tpu_custom_call.1} parent=47 // pred_fallthru
          _
      $region48: #{tpu_custom_call.1} parent=5 // pred_fallthru
        _
      %p858 = scmp.le.s32.totalorder 2, %s17
      // Predicated region
      $region53: #{tpu_custom_call.1} parent=5 // pred_check
        %p859 = pneg %p858
      $region54: #{tpu_custom_call.1} parent=5 // pred_check_branch
        %861 = sbr.rel (%p859) target = $region56
      $region55: #{tpu_custom_call.1} parent=5 // pred_region
        %s862 = ssub.s32 %s17, 2
        // Predicated region
        $region57: #{tpu_custom_call.1} parent=55 // pred_check
          %p863 = pneg %p203
        $region58: #{tpu_custom_call.1} parent=55 // pred_check_branch
          %865 = sbr.rel (%p863) target = $region60
        $region59: #{tpu_custom_call.1} parent=55 // pred_region
          %s866 = sand.u32 %s188, 1
          %s867 = scalar_lea.sflag [#allocation4], %s866
          %s868 = sand.u32 %s188, 1
          %s869 = scalar_lea.vmem [#allocation3], %s868
          %870 = dma.done %s867, 16
        $region60: #{tpu_custom_call.1} parent=55 // pred_fallthru
          _
      $region56: #{tpu_custom_call.1} parent=5 // pred_fallthru
        _
    $region6: #{tpu_custom_call.1} parent=1 // loop_footer
      %s21 = sadd.s32 1, %s17
    $region7: #{tpu_custom_call.1} parent=1 // loop_footer_branch
      %16 = sbr.rel target = $region3
    $region8: #{tpu_custom_call.1} parent=1 // loop_exit
      _
    %871 = vsyncpa [#allocation4], 1
    %s872 = scalar_lea.sflag [#allocation4], 1
    %873 = vsyncpa %s872, 1

</llo_original>
